<compile_context>
chip_gen: v5e
topology: v5e:2x2
jax: 0.10.0
libtpu: 0.0.40
codegen_flags: <defaults>
</compile_context>

<pallas_src>
import functools

import jax
import jax.numpy as jnp
from jax.experimental import pallas as pl
from jax.experimental.pallas import tpu as pltpu


def _f_ss_diag_kernel(a_ref, bT_ref, x_ref, u_ref, dx_ref, *, unroll_k):
    # a_ref : (1, W)   A_diag tiled g times (VPU broadcast multiply),  W = g*n_x
    # bT_ref: (K, W)   kron(I_g, B.T),                                 K = g*n_u
    # x_ref : (blk, W) packed chunk of states
    # u_ref : (blk, K) packed chunk of inputs
    x = x_ref[...].astype(jnp.float32)
    dx = x * a_ref[...]
    if unroll_k:
        # Degenerate contraction dim: a handful of VPU broadcast-FMAs, skip MXU.
        u = u_ref[...].astype(jnp.float32)
        for c in range(u_ref.shape[1]):
            dx = dx + u[:, c:c + 1] * bT_ref[c:c + 1, :]
    else:
        dx = dx + jnp.dot(u_ref[...].astype(jnp.float32), bT_ref[...],
                          preferred_element_type=jnp.float32)
    dx_ref[...] = dx.astype(dx_ref.dtype)


def _reference(x, u, A_diag, B):
    """Pure-JAX expression matching the PyTorch loop semantics."""
    if x.ndim == 1:
        return A_diag * x + B @ u
    return x * A_diag[None, :] + u @ B.T


def f_ss_diag_forward(x, u, A_diag, B, *, block_rows=None, use_pallas=None):
    """Pallas implementation of f_ss_diag_class.forward.

    x: (T, n_x) or (n_x,);  u: (T, n_u) or (n_u,);
    A_diag: (n_x,);  B: (n_x, n_u).  Returns dx with x's leading shape and dtype.
    """
    if x.ndim == 1:
        # Single step: two FMAs; pallas launch overhead dwarfs it.
        return _reference(x, u, A_diag, B).astype(x.dtype)

    T, n_x = x.shape
    n_u = u.shape[1]
    out_dtype = x.dtype

    if use_pallas is None:
        use_pallas = T >= 1024
    if not use_pallas:
        return _reference(x, u, A_diag, B).astype(out_dtype)

    # ---- Lane-pack g consecutive time steps into one ~128-wide row. ----------
    g = 1 if n_x >= 128 else (128 + n_x - 1) // n_x
    T_pad = ((T + g - 1) // g) * g
    if T_pad != T:
        x = jnp.pad(x, ((0, T_pad - T), (0, 0)))
        u = jnp.pad(u, ((0, T_pad - T), (0, 0)))
    rows = T_pad // g
    W = g * n_x                       # packed output/state width  (~128)
    K = g * n_u                       # packed contraction width   (~64)

    x_p = x.reshape(rows, W)
    u_p = u.reshape(rows, K)

    a_row = jnp.tile(A_diag.astype(jnp.float32), g).reshape(1, W)      # (1, W)
    bT = jnp.kron(jnp.eye(g, dtype=jnp.float32),
                  B.T.astype(jnp.float32))                             # (K, W)

    # ---- Block sizing: big lane-dense blocks, grid >= 2 when work allows. ----
    if block_rows is None:
        block_rows = 2048             # ~1 MiB of packed x per grid step (f32)
    block_rows = max(1, min(block_rows, rows))
    if rows >= 16 and block_rows > (rows + 1) // 2:
        block_rows = (rows + 1) // 2  # keep >=2 grid steps (v7x megacore, overlap)
    if block_rows != rows:
        # Sublane rule: 2nd-to-last block dim must be a multiple of 8 (or full).
        block_rows = max(8, (block_rows // 8) * 8)
    grid = (pl.cdiv(rows, block_rows),)

    unroll_k = K <= 8                 # tiny K: VPU FMAs beat a degenerate MXU call
    kernel = functools.partial(_f_ss_diag_kernel, unroll_k=unroll_k)

    dx_p = pl.pallas_call(
        kernel,
        out_shape=jax.ShapeDtypeStruct((rows, W), out_dtype),
        grid=grid,
        in_specs=[
            pl.BlockSpec((1, W), lambda i: (0, 0)),            # tiled A_diag
            pl.BlockSpec((K, W), lambda i: (0, 0)),            # kron(I_g, B.T)
            pl.BlockSpec((block_rows, W), lambda i: (i, 0)),   # packed x chunk
            pl.BlockSpec((block_rows, K), lambda i: (i, 0)),   # packed u chunk
        ],
        out_specs=pl.BlockSpec((block_rows, W), lambda i: (i, 0)),
        compiler_params=pltpu.CompilerParams(
            # No recurrence -> chunks independent; megacore may shard them.
            dimension_semantics=("parallel",),
        ),
    )(a_row, bT, x_p, u_p)

    dx = dx_p.reshape(T_pad, n_x)     # contiguous un-pack, free in the wrapper
    return dx[:T] if T_pad != T else dx


if __name__ == "__main__":
    key = jax.random.PRNGKey(0)
    k0, k1, k2, k3, k4, k5, k6, k7 = jax.random.split(key, 8)

    # State-space sizes consistent with the module.
    n_x, n_u = 4, 2

    # Module zero-initializes A_diag/B; use random values so the check is
    # meaningful (forward semantics are parameter-agnostic).
    A_diag = 0.5 * jax.random.normal(k0, (n_x,), jnp.float32)
    B = 0.5 * jax.random.normal(k1, (n_x, n_u), jnp.float32)

    # (1) Batched path through the Pallas kernel.  T is NOT a multiple of the
    #     pack factor g=32 nor of the block size, so padding + partial-last-block
    #     masking are exercised too.
    T = 4000
    x = jax.random.normal(k2, (T, n_x), jnp.float32)
    u = jax.random.normal(k3, (T, n_u), jnp.float32)
    dx = jax.block_until_ready(f_ss_diag_forward(x, u, A_diag, B, use_pallas=True))
    dx_ref = _reference(x, u, A_diag, B)
    assert dx.shape == (T, n_x) and dx.dtype == x.dtype
    assert jnp.allclose(dx, dx_ref, atol=1e-5, rtol=1e-5), "batched (pallas) mismatch"

    # (2) Tiny batched workload -> auto-dispatch to the fused pure-JAX path.
    Ts = 16
    xs = jax.random.normal(k4, (Ts, n_x), jnp.float32)
    us = jax.random.normal(k5, (Ts, n_u), jnp.float32)
    dxs = jax.block_until_ready(f_ss_diag_forward(xs, us, A_diag, B))
    assert dxs.shape == (Ts, n_x)
    assert jnp.allclose(dxs, _reference(xs, us, A_diag, B), atol=1e-5, rtol=1e-5), \
        "small-T mismatch"

    # (3) Single-step (x.ndim == 1) path.
    x1 = jax.random.normal(k6, (n_x,), jnp.float32)
    u1 = jax.random.normal(k7, (n_u,), jnp.float32)
    dx1 = jax.block_until_ready(f_ss_diag_forward(x1, u1, A_diag, B))
    assert dx1.shape == (n_x,)
    assert jnp.allclose(dx1, _reference(x1, u1, A_diag, B), atol=1e-5, rtol=1e-5), \
        "single-step mismatch"

    print("KERNEL_OK")
</pallas_src>

<mosaic_0001>
module attributes {stable_mosaic.version = 11 : i64} {
  func.func @_f_ss_diag_kernel(%arg0: i32, %arg1: memref<1x128xf32, #tpu.memory_space<vmem>>, %arg2: memref<64x128xf32, #tpu.memory_space<vmem>>, %arg3: memref<56x128xf32, #tpu.memory_space<vmem>>, %arg4: memref<56x64xf32, #tpu.memory_space<vmem>>, %arg5: memref<56x128xf32, #tpu.memory_space<vmem>>) attributes {dimension_semantics = [#tpu.dimension_semantics<parallel>], iteration_bounds = array<i64: 3>, scalar_prefetch = 0 : i64, scratch_operands = 0 : i64, tpu.core_type = #tpu.core_type<tc>, window_params = [{pipeline_mode = #tpu.pipeline_mode<synchronous>, transform_indices = @transform_0, window_bounds = array<i64: 1, 128>}, {pipeline_mode = #tpu.pipeline_mode<synchronous>, transform_indices = @transform_1, window_bounds = array<i64: 64, 128>}, {transform_indices = @transform_2, window_bounds = array<i64: 56, 128>}, {transform_indices = @transform_3, window_bounds = array<i64: 56, 64>}, {transform_indices = @transform_4, window_bounds = array<i64: 56, 128>}]} {
    %c0 = arith.constant 0 : index
    %c0_0 = arith.constant 0 : index
    %0 = vector.load %arg3[%c0, %c0_0] : memref<56x128xf32, #tpu.memory_space<vmem>>, vector<56x128xf32>
    %c0_1 = arith.constant 0 : index
    %c0_2 = arith.constant 0 : index
    %1 = vector.load %arg1[%c0_1, %c0_2] : memref<1x128xf32, #tpu.memory_space<vmem>>, vector<1x128xf32>
    %2 = vector.broadcast %1 : vector<1x128xf32> to vector<56x128xf32>
    %3 = arith.mulf %0, %2 : vector<56x128xf32>
    %c0_3 = arith.constant 0 : index
    %c0_4 = arith.constant 0 : index
    %4 = vector.load %arg4[%c0_3, %c0_4] : memref<56x64xf32, #tpu.memory_space<vmem>>, vector<56x64xf32>
    %c0_5 = arith.constant 0 : index
    %c0_6 = arith.constant 0 : index
    %5 = vector.load %arg2[%c0_5, %c0_6] : memref<64x128xf32, #tpu.memory_space<vmem>>, vector<64x128xf32>
    %cst = arith.constant dense<0.000000e+00> : vector<56x128xf32>
    %6 = tpu.matmul %4, %5, %cst {dimension_numbers = #tpu.dot_dimension_numbers<[1], [0], [0], [1], [0, 0, 1, 1], [], []>} : vector<56x64xf32>, vector<64x128xf32>, vector<56x128xf32> -> vector<56x128xf32>
    %7 = arith.addf %3, %6 : vector<56x128xf32>
    %c0_7 = arith.constant 0 : index
    %c0_8 = arith.constant 0 : index
    %8 = vector.load %arg5[%c0_7, %c0_8] : memref<56x128xf32, #tpu.memory_space<vmem>>, vector<56x128xf32>
    tpu.vector_store %arg5[%c0_7, %c0_8], %7 {strides = array<i32>} : memref<56x128xf32, #tpu.memory_space<vmem>>, vector<56x128xf32>,
    return
  }
  func.func @transform_0(%arg0: i32) -> (i32, i32) {
    %c0_i32 = arith.constant 0 : i32
    %c0_i32_0 = arith.constant 0 : i32
    %c0_i32_1 = arith.constant 0 : i32
    return %c0_i32, %c0_i32_0 : i32, i32
  }
  func.func @transform_1(%arg0: i32) -> (i32, i32) {
    %c0_i32 = arith.constant 0 : i32
    %c0_i32_0 = arith.constant 0 : i32
    %c0_i32_1 = arith.constant 0 : i32
    return %c0_i32, %c0_i32_0 : i32, i32
  }
  func.func @transform_2(%arg0: i32) -> (i32, i32) {
    %c0_i32 = arith.constant 0 : i32
    %c0_i32_0 = arith.constant 0 : i32
    return %arg0, %c0_i32 : i32, i32
  }
  func.func @transform_3(%arg0: i32) -> (i32, i32) {
    %c0_i32 = arith.constant 0 : i32
    %c0_i32_0 = arith.constant 0 : i32
    return %arg0, %c0_i32 : i32, i32
  }
  func.func @transform_4(%arg0: i32) -> (i32, i32) {
    %c0_i32 = arith.constant 0 : i32
    %c0_i32_0 = arith.constant 0 : i32
    return %arg0, %c0_i32 : i32, i32
  }
}

</mosaic_0001>

<llo_original>
// kernel: tpu_custom_call.1
$region0: #{tpu_custom_call.1}
  #allocation0 [shape = 'u32[]', space=smem, size = 0x4, offset = 0x4, fixed_abs, tag = 'smem constant byte address 0x4 - core index']
  #allocation1 [shape = 'u32[72,128]{1,0:T(1,128)}', space=vmem, size = 0x9000, scoped, tag = 'internal scratch']
  %s0 = inlined_call_operand.vmem [shape: f32[1,128], index: 0, kind: input, shape index: {}]
  %s1 = inlined_call_operand.vmem [shape: f32[64,128], index: 1, kind: input, shape index: {}]
  %s2 = inlined_call_operand.vmem [shape: f32[125,128], index: 2, kind: input, shape index: {}]
  %s3 = inlined_call_operand.vmem [shape: f32[125,64], index: 3, kind: input, shape index: {}]
  %s4 = inlined_call_operand.hbm [shape: f32[125,128], index: 4, kind: output, shape index: {}]
  %s5 = sld [smem:[#allocation0]]
  $region49: #{tpu_custom_call.1} parent=0
    _
  %s7 = ssub.s32 1, %s5
  %s8 = scalar_select 0, %s7, %s5
  $region1: #{tpu_custom_call.1} parent=0
    #allocation2 [shape = 'u8[57344]{0}', space=vmem, size = 0xe000, scoped, tag = 'output window, operand 0']
    #allocation3 [shape = 's32[2]{0}', space=sflag, size = 0x8, scoped, tag = 'scoped memory for tpu_custom_call.1']
    %9 = vsyncpa [#allocation3], 0
    %s10 = scalar_lea.sflag [#allocation3], 1
    %11 = vsyncpa %s10, 0
    loop: start=0, step=1, limit=5
    $region2: #{tpu_custom_call.1} parent=1 // loop_pre_header
      _
    $region3: #{tpu_custom_call.1} parent=1 // loop_header
      %s13 = sphi 0, %s17
      %p14 = scmp.ge.s32.totalorder %s13, 5
      %s21 = sphi 0, %s21
      %s23 = sphi 0, %s21
      %s24 = sphi 0, %s23
      %s38 = sphi 0, %s24
      %s42 = sphi 0, %s42
      %s44 = sphi 0, %s42
      %s45 = sphi 0, %s44
      %s59 = sphi 0, %s45
      %s65 = sphi 0, %s67
      %s68 = sphi 0, %s65
      %s69 = sphi 0, %s68
      %s85 = sphi 0, %s69
      %s91 = sphi 0, %s93
      %s94 = sphi 0, %s91
      %s95 = sphi 0, %s94
      %s111 = sphi 0, %s95
      %s117 = sphi 0, %s119
      %s120 = sphi 0, %s117
      %s121 = sphi 0, %s120
      %s137 = sphi 0, %s121
    $region4: #{tpu_custom_call.1} parent=1 // loop_header_branch
      %16 = sbr.rel (%p14) target = $region8
    $region5: #{tpu_custom_call.1} parent=1 // loop_body
      %s18 = ssub.s32 %s13, 1
      %s19 = ssub.s32 %s13, 2
      %s20 = sadd.s32 %s13, 1
      %s22 = sadd.s32 %s21, 1
      %p25 = scmp.eq.s32.totalorder %s13, 2
      %p26 = scmp.ne.s32.totalorder %s21, %s23
      %p27 = scmp.eq.s32.totalorder %s13, 0
      %p28 = por %p26, %p27
      %p29 = scmp.ne.s32.totalorder %s21, %s23
      %p30 = scmp.eq.s32.totalorder %s18, 2
      %p31 = por %p29, %p30
      %p32 = scmp.ne.s32.totalorder %s23, %s24
      %p33 = scmp.eq.s32.totalorder %s18, 0
      %p34 = por %p32, %p33
      %p35 = scmp.ne.s32.totalorder %s23, %s24
      %p36 = scmp.eq.s32.totalorder %s19, 2
      %p37 = por %p35, %p36
      %p39 = scmp.ne.s32.totalorder %s24, %s38
      %p40 = scmp.eq.s32.totalorder %s19, 0
      %p41 = por %p39, %p40
      %s43 = sadd.s32 %s42, 1
      %p46 = scmp.eq.s32.totalorder %s13, 2
      %p47 = scmp.ne.s32.totalorder %s42, %s44
      %p48 = scmp.eq.s32.totalorder %s13, 0
      %p49 = por %p47, %p48
      %p50 = scmp.ne.s32.totalorder %s42, %s44
      %p51 = scmp.eq.s32.totalorder %s18, 2
      %p52 = por %p50, %p51
      %p53 = scmp.ne.s32.totalorder %s44, %s45
      %p54 = scmp.eq.s32.totalorder %s18, 0
      %p55 = por %p53, %p54
      %p56 = scmp.ne.s32.totalorder %s44, %s45
      %p57 = scmp.eq.s32.totalorder %s19, 2
      %p58 = por %p56, %p57
      %p60 = scmp.ne.s32.totalorder %s45, %s59
      %p61 = scmp.eq.s32.totalorder %s19, 0
      %p62 = por %p60, %p61
      %s63 = ssub.s32 %s13, %s20
      %p64 = scmp.eq.s32.totalorder %s63, 0
      %s66 = sadd.s32 %s65, 1
      %s67 = scalar_select %p64, %s65, %s66
      %p70 = pneg %p64
      %p71 = scmp.eq.s32.totalorder %s13, 2
      %p72 = por %p70, %p71
      %p73 = scmp.ne.s32.totalorder %s65, %s68
      %p74 = scmp.eq.s32.totalorder %s13, 0
      %p75 = por %p73, %p74
      %p76 = scmp.ne.s32.totalorder %s65, %s68
      %p77 = scmp.eq.s32.totalorder %s18, 2
      %p78 = por %p76, %p77
      %p79 = scmp.ne.s32.totalorder %s68, %s69
      %p80 = scmp.eq.s32.totalorder %s18, 0
      %p81 = por %p79, %p80
      %p82 = scmp.ne.s32.totalorder %s68, %s69
      %p83 = scmp.eq.s32.totalorder %s19, 2
      %p84 = por %p82, %p83
      %p86 = scmp.ne.s32.totalorder %s69, %s85
      %p87 = scmp.eq.s32.totalorder %s19, 0
      %p88 = por %p86, %p87
      %s89 = ssub.s32 %s13, %s20
      %p90 = scmp.eq.s32.totalorder %s89, 0
      %s92 = sadd.s32 %s91, 1
      %s93 = scalar_select %p90, %s91, %s92
      %p96 = pneg %p90
      %p97 = scmp.eq.s32.totalorder %s13, 2
      %p98 = por %p96, %p97
      %p99 = scmp.ne.s32.totalorder %s91, %s94
      %p100 = scmp.eq.s32.totalorder %s13, 0
      %p101 = por %p99, %p100
      %p102 = scmp.ne.s32.totalorder %s91, %s94
      %p103 = scmp.eq.s32.totalorder %s18, 2
      %p104 = por %p102, %p103
      %p105 = scmp.ne.s32.totalorder %s94, %s95
      %p106 = scmp.eq.s32.totalorder %s18, 0
      %p107 = por %p105, %p106
      %p108 = scmp.ne.s32.totalorder %s94, %s95
      %p109 = scmp.eq.s32.totalorder %s19, 2
      %p110 = por %p108, %p109
      %p112 = scmp.ne.s32.totalorder %s95, %s111
      %p113 = scmp.eq.s32.totalorder %s19, 0
      %p114 = por %p112, %p113
      %s115 = ssub.s32 %s13, %s20
      %p116 = scmp.eq.s32.totalorder %s115, 0
      %s118 = sadd.s32 %s117, 1
      %s119 = scalar_select %p116, %s117, %s118
      %p122 = pneg %p116
      %p123 = scmp.eq.s32.totalorder %s13, 2
      %p124 = por %p122, %p123
      %p125 = scmp.ne.s32.totalorder %s117, %s120
      %p126 = scmp.eq.s32.totalorder %s13, 0
      %p127 = por %p125, %p126
      %p128 = scmp.ne.s32.totalorder %s117, %s120
      %p129 = scmp.eq.s32.totalorder %s18, 2
      %p130 = por %p128, %p129
      %p131 = scmp.ne.s32.totalorder %s120, %s121
      %p132 = scmp.eq.s32.totalorder %s18, 0
      %p133 = por %p131, %p132
      %p134 = scmp.ne.s32.totalorder %s120, %s121
      %p135 = scmp.eq.s32.totalorder %s19, 2
      %p136 = por %p134, %p135
      %p138 = scmp.ne.s32.totalorder %s121, %s137
      %p139 = scmp.eq.s32.totalorder %s19, 0
      %p140 = por %p138, %p139
      %p141 = scmp.le.s32.totalorder 1, %s13
      %p142 = scmp.lt.s32.totalorder %s13, 4
      %p143 = pnand %p141, %p142
      %p144 = pneg %p143
      // Predicated region
      $region9: #{tpu_custom_call.1} parent=5 // pred_check
        _
      $region10: #{tpu_custom_call.1} parent=5 // pred_check_branch
        %146 = sbr.rel (%p143) target = $region12
      $region11: #{tpu_custom_call.1} parent=5 // pred_region
        %s147 = ssub.s32 %s13, 1
        // Predicated region
        $region13: #{tpu_custom_call.1} parent=11 // pred_check
          %p148 = pneg %p34
        $region14: #{tpu_custom_call.1} parent=11 // pred_check_branch
          %150 = sbr.rel (%p148) target = $region16
        $region15: #{tpu_custom_call.1} parent=11 // pred_region
          _
        $region16: #{tpu_custom_call.1} parent=11 // pred_fallthru
          _
        // Predicated region
        $region17: #{tpu_custom_call.1} parent=11 // pred_check
          %p151 = pneg %p55
        $region18: #{tpu_custom_call.1} parent=11 // pred_check_branch
          %153 = sbr.rel (%p151) target = $region20
        $region19: #{tpu_custom_call.1} parent=11 // pred_region
          _
        $region20: #{tpu_custom_call.1} parent=11 // pred_fallthru
          _
      $region12: #{tpu_custom_call.1} parent=5 // pred_fallthru
        _
      %p154 = scmp.lt.s32.totalorder %s13, 3
      // Predicated region
      $region21: #{tpu_custom_call.1} parent=5 // pred_check
        %p155 = pneg %p154
      $region22: #{tpu_custom_call.1} parent=5 // pred_check_branch
        %157 = sbr.rel (%p155) target = $region24
      $region23: #{tpu_custom_call.1} parent=5 // pred_region
        // Predicated region
        $region25: #{tpu_custom_call.1} parent=23 // pred_check
          %p158 = pneg %p75
        $region26: #{tpu_custom_call.1} parent=23 // pred_check_branch
          %160 = sbr.rel (%p158) target = $region28
        $region27: #{tpu_custom_call.1} parent=23 // pred_region
          %s161 = smul.u32 7, %s13
          %s162 = ssub.s32 16, %s161
          %p163 = scmp.lt.s32.totalorder %s162, 7
          %s164 = scalar_select %p163, %s162, 7
          %s165 = smul.u32 8, %s164
          %p166 = scmp.lt.s32.totalorder %s161, 15
          %s167 = scalar_select %p166, %s161, 15
          %s168 = smul.addr %s167, 8
          %s169 = scalar_lea.vmem %s2, %s168
          %s170 = smul.u32 7, %s13
          %s171 = ssub.s32 16, %s170
          %p172 = scmp.lt.s32.totalorder %s171, 7
          %s173 = scalar_select %p172, %s171, 7
          %s174 = smul.u32 8, %s173
        $region28: #{tpu_custom_call.1} parent=23 // pred_fallthru
          _
        // Predicated region
        $region29: #{tpu_custom_call.1} parent=23 // pred_check
          %p175 = pneg %p101
        $region30: #{tpu_custom_call.1} parent=23 // pred_check_branch
          %177 = sbr.rel (%p175) target = $region32
        $region31: #{tpu_custom_call.1} parent=23 // pred_region
          %s178 = smul.u32 7, %s13
          %s179 = ssub.s32 16, %s178
          %p180 = scmp.lt.s32.totalorder %s179, 7
          %s181 = scalar_select %p180, %s179, 7
          %s182 = smul.u32 8, %s181
          %p183 = scmp.lt.s32.totalorder %s178, 15
          %s184 = scalar_select %p183, %s178, 15
          %s185 = smul.addr %s184, 8
          %s186 = scalar_lea.vmem %s3, %s185
          %s187 = smul.u32 7, %s13
          %s188 = ssub.s32 16, %s187
          %p189 = scmp.lt.s32.totalorder %s188, 7
          %s190 = scalar_select %p189, %s188, 7
          %s191 = smul.u32 8, %s190
        $region32: #{tpu_custom_call.1} parent=23 // pred_fallthru
          _
      $region24: #{tpu_custom_call.1} parent=5 // pred_fallthru
        _
      %p192 = scmp.le.s32.totalorder 1, %s13
      %p193 = scmp.lt.s32.totalorder %s13, 4
      %p194 = pnand %p192, %p193
      %p195 = pneg %p194
      // Predicated region
      $region33: #{tpu_custom_call.1} parent=5 // pred_check
        _
      $region34: #{tpu_custom_call.1} parent=5 // pred_check_branch
        %197 = sbr.rel (%p194) target = $region36
      $region35: #{tpu_custom_call.1} parent=5 // pred_region
        %s198 = ssub.s32 %s13, 1
        %p199 = pneg %p34
        %p200 = pneg %p31
        %p201 = pneg %p55
        %p202 = pneg %p52
        %s203 = smul.u32 7, %s18
        %s204 = ssub.s32 16, %s203
        %p205 = scmp.lt.s32.totalorder %s204, 7
        %s206 = scalar_select %p205, %s204, 7
        %s207 = smul.u32 8, %s206
        %p208 = scmp.lt.s32.totalorder %s203, 15
        %s209 = scalar_select %p208, %s203, 15
        %s210 = smul.addr %s209, 8
        %s211 = scalar_lea.vmem %s2, %s210
        %p212 = pneg %p81
        %p213 = pneg %p78
        %s214 = smul.u32 7, %s18
        %s215 = ssub.s32 16, %s214
        %p216 = scmp.lt.s32.totalorder %s215, 7
        %s217 = scalar_select %p216, %s215, 7
        %s218 = smul.u32 8, %s217
        %p219 = scmp.lt.s32.totalorder %s214, 15
        %s220 = scalar_select %p219, %s214, 15
        %s221 = smul.addr %s220, 8
        %s222 = scalar_lea.vmem %s3, %s221
        %p223 = pneg %p107
        %p224 = pneg %p104
        %p225 = pneg %p133
        %p226 = pneg %p130
        %s227 = sand.u32 %s120, 1
        %s228 = scalar_lea.sflag [#allocation3], %s227
        %s229 = sand.u32 %s120, 1
        %s230 = smul.addr %s229, 56
        %s231 = scalar_lea.vmem [#allocation2], %s230
        %s232 = smul.u32 7, %s18
        %s233 = ssub.s32 16, %s232
        %p234 = scmp.lt.s32.totalorder %s233, 7
        %s235 = scalar_select %p234, %s233, 7
        %s236 = smul.u32 8, %s235
        %p237 = scmp.lt.s32.totalorder %s232, 15
        %s238 = scalar_select %p237, %s232, 15
        %s239 = smul.addr %s238, 8
        %s240 = scalar_lea.vmem %s2, %s239
        %s241 = smul.u32 7, %s18
        %s242 = ssub.s32 16, %s241
        %p243 = scmp.lt.s32.totalorder %s242, 7
        %s244 = scalar_select %p243, %s242, 7
        %s245 = smul.u32 8, %s244
        %s246 = smul.u32 7, %s18
        %s247 = ssub.s32 16, %s246
        %p248 = scmp.lt.s32.totalorder %s247, 7
        %s249 = scalar_select %p248, %s247, 7
        %s250 = smul.u32 8, %s249
        %p251 = scmp.lt.s32.totalorder %s246, 15
        %s252 = scalar_select %p251, %s246, 15
        %s253 = smul.addr %s252, 8
        %s254 = scalar_lea.vmem %s3, %s253
        %s255 = smul.u32 7, %s18
        %s256 = ssub.s32 16, %s255
        %p257 = scmp.lt.s32.totalorder %s256, 7
        %s258 = scalar_select %p257, %s256, 7
        %s259 = smul.u32 8, %s258
        %s260 = smul.u32 7, %s18
        %s261 = ssub.s32 16, %s260
        %p262 = scmp.lt.s32.totalorder %s261, 7
        %s263 = scalar_select %p262, %s261, 7
        %s264 = smul.u32 8, %s263
        %v265 = vld [vmem:[%s240] sm:$0xff]
        %v266 = vld [vmem:[%s240 + $0x8] sm:$0xff]
        %v267 = vld [vmem:[%s240 + $0x10] sm:$0xff]
        %v268 = vld [vmem:[%s240 + $0x18] sm:$0xff]
        %v269 = vld [vmem:[%s240 + $0x20] sm:$0xff]
        %v270 = vld [vmem:[%s240 + $0x28] sm:$0xff]
        %v271 = vld [vmem:[%s240 + $0x30] sm:$0xff]
        %v272 = vld [vmem:[%s0] sm:$0x1]
        %v274 = vperm.slane %v272, 0
        %v276 = vmul.f32 %v265, %v274
        %v277 = vmul.f32 %v266, %v274
        %v278 = vmul.f32 %v267, %v274
        %v279 = vmul.f32 %v268, %v274
        %v280 = vmul.f32 %v269, %v274
        %v281 = vmul.f32 %v270, %v274
        %v282 = vmul.f32 %v271, %v274
        %v283 = vld [vmem:[%s254] sm:$0xff]
        %v284 = vld [vmem:[%s254 + $0x8] sm:$0xff]
        %v285 = vld [vmem:[%s254 + $0x10] sm:$0xff]
        %v286 = vld [vmem:[%s254 + $0x18] sm:$0xff]
        %v287 = vld [vmem:[%s254 + $0x20] sm:$0xff]
        %v288 = vld [vmem:[%s254 + $0x28] sm:$0xff]
        %v289 = vld [vmem:[%s254 + $0x30] sm:$0xff]
        %v290 = vld [vmem:[%s1] sm:$0xff]
        %v291 = vld [vmem:[%s1 + $0x8] sm:$0xff]
        %v292 = vld [vmem:[%s1 + $0x10] sm:$0xff]
        %v293 = vld [vmem:[%s1 + $0x18] sm:$0xff]
        %v294 = vld [vmem:[%s1 + $0x20] sm:$0xff]
        %v295 = vld [vmem:[%s1 + $0x28] sm:$0xff]
        %v296 = vld [vmem:[%s1 + $0x30] sm:$0xff]
        %v297 = vld [vmem:[%s1 + $0x38] sm:$0xff]
        %vm298 = vcmask 523264
        %v300 = vsel %vm298, %v283, 0
        %v303 = vsel %vm298, %v284, 0
        %v306 = vsel %vm298, %v285, 0
        %v309 = vsel %vm298, %v286, 0
        %v312 = vsel %vm298, %v287, 0
        %v315 = vsel %vm298, %v288, 0
        %v318 = vsel %vm298, %v289, 0
        %320 = vmatpush.msra.mxu0 0.0
        %321 = vmatpush.msra.mxu0 0.0
        %322 = vmatpush.msra.mxu0 0.0
        %323 = vmatpush.msra.mxu0 0.0
        %324 = vmatpush.msra.mxu0 0.0
        %325 = vmatpush.msra.mxu0 0.0
        %326 = vmatpush.msra.mxu0 0.0
        %327 = vmatpush.msra.mxu0 0.0
        %328 = vmatpush.msra.mxu0 %v297
        %329 = vmatpush.msra.mxu0 %v296
        %330 = vmatpush.msra.mxu0 %v295
        %331 = vmatpush.msra.mxu0 %v294
        %332 = vmatpush.msra.mxu0 %v293
        %333 = vmatpush.msra.mxu0 %v292
        %334 = vmatpush.msra.mxu0 %v291
        %335 = vmatpush.msra.mxu0 %v290
        %336 = vmatmul.f32.gmra.mxu0 %v300
        %v337 = vpop.f32.mrf.mxu0
        %v338 = vadd.f32 0.0, %v337
        %339 = vmatmul.f32.gmra.mxu0 %v303
        %v340 = vpop.f32.mrf.mxu0
        %v341 = vadd.f32 0.0, %v340
        %342 = vmatmul.f32.gmra.mxu0 %v306
        %v343 = vpop.f32.mrf.mxu0
        %v344 = vadd.f32 0.0, %v343
        %345 = vmatmul.f32.gmra.mxu0 %v309
        %v346 = vpop.f32.mrf.mxu0
        %v347 = vadd.f32 0.0, %v346
        %348 = vmatmul.f32.gmra.mxu0 %v312
        %v349 = vpop.f32.mrf.mxu0
        %v350 = vadd.f32 0.0, %v349
        %351 = vmatmul.f32.gmra.mxu0 %v315
        %v352 = vpop.f32.mrf.mxu0
        %v353 = vadd.f32 0.0, %v352
        %354 = vmatmul.f32.gmra.mxu0 %v318
        %v355 = vpop.f32.mrf.mxu0
        %v356 = vadd.f32 0.0, %v355
        %357 = vdwg.mxu0
        %v358 = vadd.f32 %v276, %v338
        %v359 = vadd.f32 %v277, %v341
        %v360 = vadd.f32 %v278, %v344
        %v361 = vadd.f32 %v279, %v347
        %v362 = vadd.f32 %v280, %v350
        %v363 = vadd.f32 %v281, %v353
        %v364 = vadd.f32 %v282, %v356
        %365 = vst [vmem:[%s231] sm:$0xff] %v358
        %366 = vst [vmem:[%s231 + $0x8] sm:$0xff] %v359
        %367 = vst [vmem:[%s231 + $0x10] sm:$0xff] %v360
        %368 = vst [vmem:[%s231 + $0x18] sm:$0xff] %v361
        %369 = vst [vmem:[%s231 + $0x20] sm:$0xff] %v362
        %370 = vst [vmem:[%s231 + $0x28] sm:$0xff] %v363
        %371 = vst [vmem:[%s231 + $0x30] sm:$0xff] %v364
        %s372 = sand.u32 %s120, 1
        %s373 = scalar_lea.sflag [#allocation3], %s372
        %s374 = sand.u32 %s120, 1
        %s375 = smul.addr %s374, 56
        %s376 = scalar_lea.vmem [#allocation2], %s375
        // Predicated region
        $region37: #{tpu_custom_call.1} parent=35 // pred_check
          %p377 = pneg %p130
        $region38: #{tpu_custom_call.1} parent=35 // pred_check_branch
          %379 = sbr.rel (%p377) target = $region40
        $region39: #{tpu_custom_call.1} parent=35 // pred_region
          %s380 = smul.u32 7, %s18
          %s381 = ssub.s32 16, %s380
          %p382 = scmp.lt.s32.totalorder %s381, 7
          %s383 = scalar_select %p382, %s381, 7
          %s384 = smul.u32 8, %s383
          %s385 = ssub.s32 56, %s384
          %s386 = sshll.u32 %s385, 4
          %387 = vsyncadd %s373, %s386
          %p388 = scmp.ne.s32.totalorder 0, %s384
          %s389 = smul.addr %s380, 8
          %s390 = scalar_lea.hbm %s4, %s389
          %s391 = smul.u32 8, %s383
          %s392 = sshll.u32 %s376, 4
          %s393 = int_to_ptr.vmem [resolvable:$true] %s392
          %s394 = sshll.u32 %s390, 4
          %s395 = int_to_ptr.hbm [resolvable:$true] %s394
          %s396 = sshll.u32 %s391, 4
          %400 = dma.vmem_to_hbm [thread:$0]  (%p388), %s393, %s396, %s395, %s373, 128, 128, 8
        $region40: #{tpu_custom_call.1} parent=35 // pred_fallthru
          _
      $region36: #{tpu_custom_call.1} parent=5 // pred_fallthru
        _
      %p401 = scmp.le.s32.totalorder 2, %s13
      // Predicated region
      $region41: #{tpu_custom_call.1} parent=5 // pred_check
        %p402 = pneg %p401
      $region42: #{tpu_custom_call.1} parent=5 // pred_check_branch
        %404 = sbr.rel (%p402) target = $region44
      $region43: #{tpu_custom_call.1} parent=5 // pred_region
        %s405 = ssub.s32 %s13, 2
        // Predicated region
        $region45: #{tpu_custom_call.1} parent=43 // pred_check
          %p406 = pneg %p136
        $region46: #{tpu_custom_call.1} parent=43 // pred_check_branch
          %408 = sbr.rel (%p406) target = $region48
        $region47: #{tpu_custom_call.1} parent=43 // pred_region
          %s409 = sand.u32 %s121, 1
          %s410 = scalar_lea.sflag [#allocation3], %s409
          %s411 = sand.u32 %s121, 1
          %s412 = smul.addr %s411, 56
          %s413 = scalar_lea.vmem [#allocation2], %s412
          %415 = dma.done %s410, 896
        $region48: #{tpu_custom_call.1} parent=43 // pred_fallthru
          _
      $region44: #{tpu_custom_call.1} parent=5 // pred_fallthru
        _
    $region6: #{tpu_custom_call.1} parent=1 // loop_footer
      %s17 = sadd.s32 1, %s13
    $region7: #{tpu_custom_call.1} parent=1 // loop_footer_branch
      %12 = sbr.rel target = $region3
    $region8: #{tpu_custom_call.1} parent=1 // loop_exit
      _
    %416 = vsyncpa [#allocation3], 1
    %s417 = scalar_lea.sflag [#allocation3], 1
    %418 = vsyncpa %s417, 1

</llo_original>
